<compile_context>
chip_gen: v7x
topology: tpu7x:2x2x1
jax: 0.10.0
libtpu: 0.0.40
codegen_flags: <defaults>
</compile_context>

<pallas_src>
import functools

import jax
import jax.numpy as jnp
from jax.experimental import pallas as pl
from jax.experimental.pallas import tpu as pltpu


LANE = 128          # lane width: feature dims padded to multiples of this
BATCH_TILE = 16     # bf16 min sublane tile; also the batch-grid tile


def _round_up(n: int, m: int) -> int:
    return ((n + m - 1) // m) * m


def _pad_to(x, shape):
    pads = [(0, s - d) for d, s in zip(x.shape, shape)]
    return jnp.pad(x, pads)


def _fused_mlp_kernel(n_layers, *refs):
    """One batch tile through the whole affine chain, activations in vregs."""
    x_ref = refs[0]
    w_refs = refs[1:1 + n_layers]
    b_refs = refs[1 + n_layers:1 + 2 * n_layers]
    o_ref = refs[1 + 2 * n_layers]

    h = x_ref[...]                                   # bf16 [TB, D0p]
    for k in range(n_layers):
        acc = jnp.dot(h, w_refs[k][...],             # bf16 x bf16 -> f32 (MXU)
                      preferred_element_type=jnp.float32)
        acc = acc + b_refs[k][...]                   # f32 bias folded pre-cast
        if k < n_layers - 1:
            h = acc.astype(jnp.bfloat16)             # bf16 activations between layers
        else:
            o_ref[...] = acc.astype(o_ref.dtype)     # single store, storage dtype


def fused_mlp_pallas(x_pad, weights, biases, out_dtype):
    """Run the full padded affine chain in one pallas_call.

    x_pad:   [Bp, D0p]  bf16, Bp % BATCH_TILE == 0, D0p % 128 == 0
    weights: list of [Dk_p, Dk1_p] bf16
    biases:  list of [1, Dk1_p]    f32
    """
    Bp, D0p = x_pad.shape
    n_layers = len(weights)
    d_out_p = weights[-1].shape[1]
    grid = (Bp // BATCH_TILE,)

    in_specs = [pl.BlockSpec((BATCH_TILE, D0p), lambda i: (i, 0))]
    # Weights/biases: constant index_map across the batch axis -> VMEM-resident.
    for w in weights:
        in_specs.append(pl.BlockSpec(w.shape, lambda i: (0, 0)))
    for b in biases:
        in_specs.append(pl.BlockSpec(b.shape, lambda i: (0, 0)))

    out_spec = pl.BlockSpec((BATCH_TILE, d_out_p), lambda i: (i, 0))

    return pl.pallas_call(
        functools.partial(_fused_mlp_kernel, n_layers),
        out_shape=jax.ShapeDtypeStruct((Bp, d_out_p), out_dtype),
        grid=grid,
        in_specs=in_specs,
        out_specs=out_spec,
        compiler_params=pltpu.CompilerParams(
            dimension_semantics=("parallel",),   # shard batch tiles across TCs (v7x)
        ),
    )(x_pad, *weights, *biases)


class LinearNetwork:
    """JAX/Pallas analogue of AbstractLinearNetwork with a concrete forward."""

    def __init__(self, topology, key):
        self._topology = tuple(topology)
        self.n_layers = len(topology) - 1
        self._padded_dims = tuple(_round_up(d, LANE) for d in self._topology)

        self._weights = []   # bf16 [Din_p, Dout_p], zero-padded
        self._biases = []    # f32  [1, Dout_p],     zero-padded
        for k, (din, dout) in enumerate(zip(topology[:-1], topology[1:])):
            key, kw, kb = jax.random.split(key, 3)
            # torch.nn.Linear-style uniform(-1/sqrt(din), 1/sqrt(din)) init.
            bound = 1.0 / float(din) ** 0.5
            w = jax.random.uniform(kw, (din, dout), jnp.float32, -bound, bound)
            b = jax.random.uniform(kb, (dout,), jnp.float32, -bound, bound)
            din_p, dout_p = self._padded_dims[k], self._padded_dims[k + 1]
            self._weights.append(_pad_to(w, (din_p, dout_p)).astype(jnp.bfloat16))
            self._biases.append(_pad_to(b.reshape(1, dout), (1, dout_p)))

    def _pad_input(self, x):
        B, Din = x.shape
        assert Din == self._topology[0]
        Bp = _round_up(max(B, BATCH_TILE), BATCH_TILE)
        return _pad_to(x, (Bp, self._padded_dims[0]))

    def forward(self, x):
        B = x.shape[0]
        x_pad = self._pad_input(x).astype(jnp.bfloat16)
        out_pad = fused_mlp_pallas(x_pad, self._weights, self._biases, jnp.float32)
        return out_pad[:B, :self._topology[-1]]

    def forward_ref(self, x):
        """Pure-JAX reference mirroring the kernel's bf16/f32 arithmetic."""
        B = x.shape[0]
        h = self._pad_input(x).astype(jnp.bfloat16).astype(jnp.float32)
        for k in range(self.n_layers):
            w = self._weights[k].astype(jnp.float32)
            h = h @ w + self._biases[k]
            if k < self.n_layers - 1:
                h = h.astype(jnp.bfloat16).astype(jnp.float32)
        return h[:B, :self._topology[-1]]


if __name__ == "__main__":
    key = jax.random.PRNGKey(0)
    key, kx, kp = jax.random.split(key, 3)

    topology = (32, 64, 16)          # small linear-network topology
    batch = 8
    x = jax.random.normal(kx, (batch, topology[0]), jnp.float32)

    net = LinearNetwork(topology, kp)

    out = net.forward(x)
    out = jax.block_until_ready(out)

    ref = net.forward_ref(x)
    assert out.shape == (batch, topology[-1])
    assert out.dtype == jnp.float32
    # bf16 inputs/weights with f32 accumulation: MXU vs XLA only differ by
    # accumulation order, so a modest tolerance suffices.
    assert jnp.allclose(out, ref, atol=1e-3, rtol=1e-3), (
        float(jnp.max(jnp.abs(out - ref))))

    print("KERNEL_OK")
</pallas_src>

<mosaic_0001>
module attributes {stable_mosaic.version = 11 : i64} {
  func.func @_fused_mlp_kernel(%arg0: i32, %arg1: memref<16x128xbf16, #tpu.memory_space<vmem>>, %arg2: memref<128x128xbf16, #tpu.memory_space<vmem>>, %arg3: memref<128x128xbf16, #tpu.memory_space<vmem>>, %arg4: memref<1x128xf32, #tpu.memory_space<vmem>>, %arg5: memref<1x128xf32, #tpu.memory_space<vmem>>, %arg6: memref<16x128xf32, #tpu.memory_space<vmem>>) attributes {dimension_semantics = [#tpu.dimension_semantics<parallel>], iteration_bounds = array<i64: 1>, scalar_prefetch = 0 : i64, scratch_operands = 0 : i64, tpu.core_type = #tpu.core_type<tc>, window_params = [{transform_indices = @transform_0, window_bounds = array<i64: 16, 128>}, {pipeline_mode = #tpu.pipeline_mode<synchronous>, transform_indices = @transform_1, window_bounds = array<i64: 128, 128>}, {pipeline_mode = #tpu.pipeline_mode<synchronous>, transform_indices = @transform_2, window_bounds = array<i64: 128, 128>}, {pipeline_mode = #tpu.pipeline_mode<synchronous>, transform_indices = @transform_3, window_bounds = array<i64: 1, 128>}, {pipeline_mode = #tpu.pipeline_mode<synchronous>, transform_indices = @transform_4, window_bounds = array<i64: 1, 128>}, {transform_indices = @transform_5, window_bounds = array<i64: 16, 128>}]} {
    %c0 = arith.constant 0 : index
    %c0_0 = arith.constant 0 : index
    %0 = vector.load %arg1[%c0, %c0_0] : memref<16x128xbf16, #tpu.memory_space<vmem>>, vector<16x128xbf16>
    %c0_1 = arith.constant 0 : index
    %c0_2 = arith.constant 0 : index
    %1 = vector.load %arg2[%c0_1, %c0_2] : memref<128x128xbf16, #tpu.memory_space<vmem>>, vector<128x128xbf16>
    %cst = arith.constant dense<0.000000e+00> : vector<16x128xf32>
    %2 = tpu.matmul %0, %1, %cst {dimension_numbers = #tpu.dot_dimension_numbers<[1], [0], [0], [1], [0, 0, 1, 1], [], []>} : vector<16x128xbf16>, vector<128x128xbf16>, vector<16x128xf32> -> vector<16x128xf32>
    %c0_3 = arith.constant 0 : index
    %c0_4 = arith.constant 0 : index
    %3 = vector.load %arg4[%c0_3, %c0_4] : memref<1x128xf32, #tpu.memory_space<vmem>>, vector<1x128xf32>
    %4 = vector.broadcast %3 : vector<1x128xf32> to vector<16x128xf32>
    %5 = arith.addf %2, %4 : vector<16x128xf32>
    %6 = arith.truncf %5 : vector<16x128xf32> to vector<16x128xbf16>
    %c0_5 = arith.constant 0 : index
    %c0_6 = arith.constant 0 : index
    %7 = vector.load %arg3[%c0_5, %c0_6] : memref<128x128xbf16, #tpu.memory_space<vmem>>, vector<128x128xbf16>
    %cst_7 = arith.constant dense<0.000000e+00> : vector<16x128xf32>
    %8 = tpu.matmul %6, %7, %cst_7 {dimension_numbers = #tpu.dot_dimension_numbers<[1], [0], [0], [1], [0, 0, 1, 1], [], []>} : vector<16x128xbf16>, vector<128x128xbf16>, vector<16x128xf32> -> vector<16x128xf32>
    %c0_8 = arith.constant 0 : index
    %c0_9 = arith.constant 0 : index
    %9 = vector.load %arg5[%c0_8, %c0_9] : memref<1x128xf32, #tpu.memory_space<vmem>>, vector<1x128xf32>
    %10 = vector.broadcast %9 : vector<1x128xf32> to vector<16x128xf32>
    %11 = arith.addf %8, %10 : vector<16x128xf32>
    %c0_10 = arith.constant 0 : index
    %c0_11 = arith.constant 0 : index
    %12 = vector.load %arg6[%c0_10, %c0_11] : memref<16x128xf32, #tpu.memory_space<vmem>>, vector<16x128xf32>
    tpu.vector_store %arg6[%c0_10, %c0_11], %11 {strides = array<i32>} : memref<16x128xf32, #tpu.memory_space<vmem>>, vector<16x128xf32>,
    return
  }
  func.func @transform_0(%arg0: i32) -> (i32, i32) {
    %c0_i32 = arith.constant 0 : i32
    %c0_i32_0 = arith.constant 0 : i32
    return %arg0, %c0_i32 : i32, i32
  }
  func.func @transform_1(%arg0: i32) -> (i32, i32) {
    %c0_i32 = arith.constant 0 : i32
    %c0_i32_0 = arith.constant 0 : i32
    %c0_i32_1 = arith.constant 0 : i32
    return %c0_i32, %c0_i32_0 : i32, i32
  }
  func.func @transform_2(%arg0: i32) -> (i32, i32) {
    %c0_i32 = arith.constant 0 : i32
    %c0_i32_0 = arith.constant 0 : i32
    %c0_i32_1 = arith.constant 0 : i32
    return %c0_i32, %c0_i32_0 : i32, i32
  }
  func.func @transform_3(%arg0: i32) -> (i32, i32) {
    %c0_i32 = arith.constant 0 : i32
    %c0_i32_0 = arith.constant 0 : i32
    %c0_i32_1 = arith.constant 0 : i32
    return %c0_i32, %c0_i32_0 : i32, i32
  }
  func.func @transform_4(%arg0: i32) -> (i32, i32) {
    %c0_i32 = arith.constant 0 : i32
    %c0_i32_0 = arith.constant 0 : i32
    %c0_i32_1 = arith.constant 0 : i32
    return %c0_i32, %c0_i32_0 : i32, i32
  }
  func.func @transform_5(%arg0: i32) -> (i32, i32) {
    %c0_i32 = arith.constant 0 : i32
    %c0_i32_0 = arith.constant 0 : i32
    return %arg0, %c0_i32 : i32, i32
  }
}

</mosaic_0001>

<llo_original>
// kernel: tpu_custom_call.1
$region0: #{tpu_custom_call.1}
  #allocation0 [shape = 'u32[]', space=smem, size = 0x4, offset = 0x4, fixed_abs, tag = 'smem constant byte address 0x4 - core index']
  #allocation1 [shape = 'u32[144,128]{1,0:T(1,128)}', space=vmem, size = 0x12000, scoped, tag = 'internal scratch']
  %s0 = inlined_call_operand.hbm [shape: bf16[16,128], index: 0, kind: input, shape index: {}]
  %s1 = inlined_call_operand.hbm [shape: bf16[128,128], index: 1, kind: input, shape index: {}]
  %s2 = inlined_call_operand.hbm [shape: bf16[128,128], index: 2, kind: input, shape index: {}]
  %s3 = inlined_call_operand.vmem [shape: f32[1,128], index: 3, kind: input, shape index: {}]
  %s4 = inlined_call_operand.vmem [shape: f32[1,128], index: 4, kind: input, shape index: {}]
  %s5 = inlined_call_operand.hbm [shape: f32[16,128], index: 5, kind: output, shape index: {}]
  %s6 = sld [smem:[#allocation0]]
  $region42: #{tpu_custom_call.1} parent=0
    _
  %s8 = ssub.s32 1, %s6
  %s9 = scalar_select 0, %s8, %s6
  $region1: #{tpu_custom_call.1} parent=0
    #allocation2 [shape = 'u8[4096]{0}', space=vmem, size = 0x1000, scoped, tag = 'input window, operand 0, single buffered']
    #allocation3 [shape = 's32[1]{0}', space=sflag, size = 0x4, scoped, tag = 'scoped memory for tpu_custom_call.1']
    #allocation4 [shape = 's32[1]{0}', space=sflag, size = 0x4, scoped, tag = 'scoped memory for tpu_custom_call.1']
    #allocation5 [shape = 'u8[32768]{0}', space=vmem, size = 0x8000, scoped, tag = 'input window, operand 1, single buffered']
    #allocation6 [shape = 's32[1]{0}', space=sflag, size = 0x4, scoped, tag = 'scoped memory for tpu_custom_call.1']
    #allocation7 [shape = 'u8[32768]{0}', space=vmem, size = 0x8000, scoped, tag = 'input window, operand 2, single buffered']
    #allocation8 [shape = 'u8[8192]{0}', space=vmem, size = 0x2000, scoped, tag = 'output window, operand 0, single buffered']
    %10 = vsyncpa [#allocation3], 0
    %11 = vsyncpa [#allocation6], 0
    %12 = vsyncpa [#allocation4], 0
    // Predicated region
    $region2: #{tpu_custom_call.1} parent=1 // pred_check
      _
    $region3: #{tpu_custom_call.1} parent=1 // pred_check_branch
      %14 = sbr.rel (0) target = $region5
    $region4: #{tpu_custom_call.1} parent=1 // pred_region
      %s16 = ssub.s32 128, 128
      %17 = vsyncadd [#allocation3], %s16
      %s18 = sshll.u32 [#allocation2], 4
      %s19 = int_to_ptr.vmem [resolvable:$true] %s18
      %24 = dma.hbm_to_vmem [thread:$0]  %s0, 128, %s19, [#allocation3], 64, 64, 4
    $region5: #{tpu_custom_call.1} parent=1 // pred_fallthru
      _
    // Predicated region
    $region6: #{tpu_custom_call.1} parent=1 // pred_check
      _
    $region7: #{tpu_custom_call.1} parent=1 // pred_check_branch
      %26 = sbr.rel (0) target = $region9
    $region8: #{tpu_custom_call.1} parent=1 // pred_region
      %s28 = ssub.s32 1024, 1024
      %29 = vsyncadd [#allocation6], %s28
      %s30 = sshll.u32 [#allocation5], 4
      %s31 = int_to_ptr.vmem [resolvable:$true] %s30
      %36 = dma.hbm_to_vmem [thread:$0]  %s1, 1024, %s31, [#allocation6], 64, 64, 4
    $region9: #{tpu_custom_call.1} parent=1 // pred_fallthru
      _
    // Predicated region
    $region10: #{tpu_custom_call.1} parent=1 // pred_check
      _
    $region11: #{tpu_custom_call.1} parent=1 // pred_check_branch
      %38 = sbr.rel (0) target = $region13
    $region12: #{tpu_custom_call.1} parent=1 // pred_region
      %s40 = ssub.s32 1024, 1024
      %41 = vsyncadd [#allocation6], %s40
      %s42 = sshll.u32 [#allocation7], 4
      %s43 = int_to_ptr.vmem [resolvable:$true] %s42
      %48 = dma.hbm_to_vmem [thread:$0]  %s2, 1024, %s43, [#allocation6], 64, 64, 4
    $region13: #{tpu_custom_call.1} parent=1 // pred_fallthru
      _
    // Predicated region
    $region14: #{tpu_custom_call.1} parent=1 // pred_check
      _
    $region15: #{tpu_custom_call.1} parent=1 // pred_check_branch
      %50 = sbr.rel (0) target = $region17
    $region16: #{tpu_custom_call.1} parent=1 // pred_region
      _
    $region17: #{tpu_custom_call.1} parent=1 // pred_fallthru
      _
    // Predicated region
    $region18: #{tpu_custom_call.1} parent=1 // pred_check
      _
    $region19: #{tpu_custom_call.1} parent=1 // pred_check_branch
      %52 = sbr.rel (0) target = $region21
    $region20: #{tpu_custom_call.1} parent=1 // pred_region
      _
    $region21: #{tpu_custom_call.1} parent=1 // pred_fallthru
      _
    // Predicated region
    $region22: #{tpu_custom_call.1} parent=1 // pred_check
      _
    $region23: #{tpu_custom_call.1} parent=1 // pred_check_branch
      %54 = sbr.rel (0) target = $region25
    $region24: #{tpu_custom_call.1} parent=1 // pred_region
      %55 = dma.done [#allocation3], 128
    $region25: #{tpu_custom_call.1} parent=1 // pred_fallthru
      _
    // Predicated region
    $region26: #{tpu_custom_call.1} parent=1 // pred_check
      _
    $region27: #{tpu_custom_call.1} parent=1 // pred_check_branch
      %57 = sbr.rel (0) target = $region29
    $region28: #{tpu_custom_call.1} parent=1 // pred_region
      %58 = dma.done [#allocation6], 1024
    $region29: #{tpu_custom_call.1} parent=1 // pred_fallthru
      _
    // Predicated region
    $region30: #{tpu_custom_call.1} parent=1 // pred_check
      _
    $region31: #{tpu_custom_call.1} parent=1 // pred_check_branch
      %60 = sbr.rel (0) target = $region33
    $region32: #{tpu_custom_call.1} parent=1 // pred_region
      %61 = dma.done [#allocation6], 1024
    $region33: #{tpu_custom_call.1} parent=1 // pred_fallthru
      _
    %v63 = vld [vmem:[#allocation2] sm:$0xf]
    %v64 = vld [vmem:[#allocation2 + $0x4] sm:$0xf]
    %v65 = vld [vmem:[#allocation5] sm:$0xf]
    %v66 = vld [vmem:[#allocation5 + $0x4] sm:$0xf]
    %v67 = vld [vmem:[#allocation5 + $0x8] sm:$0xf]
    %v68 = vld [vmem:[#allocation5 + $0xc] sm:$0xf]
    %v69 = vld [vmem:[#allocation5 + $0x10] sm:$0xf]
    %v70 = vld [vmem:[#allocation5 + $0x14] sm:$0xf]
    %v71 = vld [vmem:[#allocation5 + $0x18] sm:$0xf]
    %v72 = vld [vmem:[#allocation5 + $0x1c] sm:$0xf]
    %v73 = vld [vmem:[#allocation5 + $0x20] sm:$0xf]
    %v74 = vld [vmem:[#allocation5 + $0x24] sm:$0xf]
    %v75 = vld [vmem:[#allocation5 + $0x28] sm:$0xf]
    %v76 = vld [vmem:[#allocation5 + $0x2c] sm:$0xf]
    %v77 = vld [vmem:[#allocation5 + $0x30] sm:$0xf]
    %v78 = vld [vmem:[#allocation5 + $0x34] sm:$0xf]
    %v79 = vld [vmem:[#allocation5 + $0x38] sm:$0xf]
    %v80 = vld [vmem:[#allocation5 + $0x3c] sm:$0xf]
    %v81 = vld [vmem:[%s3] sm:$0x1]
    %v83 = vlaneseq
    %v84 = vshrl.u32 %v83, 7
    %v85 = vsub.s32 0, %v84
    %v86 = vrot.slane %v81, %v85
    %v90 = vunpack.c.l.b16 %v63
    %v91 = vunpack.c.l.b16 %v64
    %v92 = vpack.c.b16 %v91, %v90
    %v110 = vunpack.c.l.b16 %v65
    %v111 = vunpack.c.l.b16 %v66
    %v112 = vunpack.c.l.b16 %v67
    %v113 = vunpack.c.l.b16 %v68
    %v114 = vunpack.c.l.b16 %v69
    %v115 = vunpack.c.l.b16 %v70
    %v116 = vunpack.c.l.b16 %v71
    %v117 = vunpack.c.l.b16 %v72
    %v118 = vunpack.c.l.b16 %v73
    %v119 = vunpack.c.l.b16 %v74
    %v120 = vunpack.c.l.b16 %v75
    %v121 = vunpack.c.l.b16 %v76
    %v122 = vunpack.c.l.b16 %v77
    %v123 = vunpack.c.l.b16 %v78
    %v124 = vunpack.c.l.b16 %v79
    %v125 = vunpack.c.l.b16 %v80
    %v126 = vpack.c.b16 %v111, %v110
    %v127 = vpack.c.b16 %v113, %v112
    %v128 = vpack.c.b16 %v115, %v114
    %v129 = vpack.c.b16 %v117, %v116
    %v130 = vpack.c.b16 %v119, %v118
    %v131 = vpack.c.b16 %v121, %v120
    %v132 = vpack.c.b16 %v123, %v122
    %v133 = vpack.c.b16 %v125, %v124
    %142 = vmatprep.subr.bf16.mxu0 0
    %143 = vmatpush1.bf16.msra.mxu0 %v126
    %144 = vmatprep.subr.bf16.mxu0 0
    %145 = vmatpush1.bf16.msra.mxu0 %v127
    %146 = vmatprep.subr.bf16.mxu0 0
    %147 = vmatpush1.bf16.msra.mxu0 %v128
    %148 = vmatprep.subr.bf16.mxu0 0
    %149 = vmatpush1.bf16.msra.mxu0 %v129
    %150 = vmatprep.subr.bf16.mxu0 0
    %151 = vmatpush1.bf16.msra.mxu0 %v130
    %152 = vmatprep.subr.bf16.mxu0 0
    %153 = vmatpush1.bf16.msra.mxu0 %v131
    %154 = vmatprep.subr.bf16.mxu0 0
    %155 = vmatpush1.bf16.msra.mxu0 %v132
    %156 = vmatprep.subr.bf16.mxu0 0
    %157 = vmatpush1.bf16.msra.mxu0 %v133
    %158 = vmatprep.subr.bf16.mxu0 0
    %159 = vmatpush1.bf16.msra.mxu0 0
    %160 = vmatprep.subr.bf16.mxu0 0
    %161 = vmatpush1.bf16.msra.mxu0 0
    %162 = vmatprep.subr.bf16.mxu0 0
    %163 = vmatpush1.bf16.msra.mxu0 0
    %164 = vmatprep.subr.bf16.mxu0 0
    %165 = vmatpush1.bf16.msra.mxu0 0
    %166 = vmatprep.subr.bf16.mxu0 0
    %167 = vmatpush1.bf16.msra.mxu0 0
    %168 = vmatprep.subr.bf16.mxu0 0
    %169 = vmatpush1.bf16.msra.mxu0 0
    %170 = vmatprep.subr.bf16.mxu0 0
    %171 = vmatpush1.bf16.msra.mxu0 0
    %172 = vmatprep.subr.bf16.mxu0 0
    %173 = vmatpush1.bf16.msra.mxu0 0
    %174 = vmatprep.mubr.bf16.mxu0 0
    %175 = vmatmul.mubr.bf16.gmra.mrb[0].mxu0 %v92
    %v176 = vpop.f32.mrb[0].mxu0
    %v177 = vadd.f32 %v86, %v176
    %v178 = vpop.f32.mrb[0].mxu0
    %v179 = vpop.f32.mrb[0].mxu0
    %v180 = vadd.f32 %v86, %v179
    %v181 = vpop.f32.mrb[0].mxu0
    %182 = vdwg.mxu0
    %v183 = vpack.c.bf16 %v180, %v177
    %v184 = vld [vmem:[#allocation7] sm:$0xf]
    %v185 = vld [vmem:[#allocation7 + $0x4] sm:$0xf]
    %v186 = vld [vmem:[#allocation7 + $0x8] sm:$0xf]
    %v187 = vld [vmem:[#allocation7 + $0xc] sm:$0xf]
    %v188 = vld [vmem:[#allocation7 + $0x10] sm:$0xf]
    %v189 = vld [vmem:[#allocation7 + $0x14] sm:$0xf]
    %v190 = vld [vmem:[#allocation7 + $0x18] sm:$0xf]
    %v191 = vld [vmem:[#allocation7 + $0x1c] sm:$0xf]
    %v192 = vld [vmem:[#allocation7 + $0x20] sm:$0xf]
    %v193 = vld [vmem:[#allocation7 + $0x24] sm:$0xf]
    %v194 = vld [vmem:[#allocation7 + $0x28] sm:$0xf]
    %v195 = vld [vmem:[#allocation7 + $0x2c] sm:$0xf]
    %v196 = vld [vmem:[#allocation7 + $0x30] sm:$0xf]
    %v197 = vld [vmem:[#allocation7 + $0x34] sm:$0xf]
    %v198 = vld [vmem:[#allocation7 + $0x38] sm:$0xf]
    %v199 = vld [vmem:[#allocation7 + $0x3c] sm:$0xf]
    %v200 = vld [vmem:[%s4] sm:$0x1]
    %v202 = vlaneseq
    %v203 = vshrl.u32 %v202, 7
    %v204 = vsub.s32 0, %v203
    %v205 = vrot.slane %v200, %v204
    %v223 = vunpack.c.l.b16 %v184
    %v224 = vunpack.c.l.b16 %v185
    %v225 = vunpack.c.l.b16 %v186
    %v226 = vunpack.c.l.b16 %v187
    %v227 = vunpack.c.l.b16 %v188
    %v228 = vunpack.c.l.b16 %v189
    %v229 = vunpack.c.l.b16 %v190
    %v230 = vunpack.c.l.b16 %v191
    %v231 = vunpack.c.l.b16 %v192
    %v232 = vunpack.c.l.b16 %v193
    %v233 = vunpack.c.l.b16 %v194
    %v234 = vunpack.c.l.b16 %v195
    %v235 = vunpack.c.l.b16 %v196
    %v236 = vunpack.c.l.b16 %v197
    %v237 = vunpack.c.l.b16 %v198
    %v238 = vunpack.c.l.b16 %v199
    %v239 = vpack.c.b16 %v224, %v223
    %v240 = vpack.c.b16 %v226, %v225
    %v241 = vpack.c.b16 %v228, %v227
    %v242 = vpack.c.b16 %v230, %v229
    %v243 = vpack.c.b16 %v232, %v231
    %v244 = vpack.c.b16 %v234, %v233
    %v245 = vpack.c.b16 %v236, %v235
    %v246 = vpack.c.b16 %v238, %v237
    %255 = vmatprep.subr.bf16.mxu0 0
    %256 = vmatpush1.bf16.msra.mxu0 %v239
    %257 = vmatprep.subr.bf16.mxu0 0
    %258 = vmatpush1.bf16.msra.mxu0 %v240
    %259 = vmatprep.subr.bf16.mxu0 0
    %260 = vmatpush1.bf16.msra.mxu0 %v241
    %261 = vmatprep.subr.bf16.mxu0 0
    %262 = vmatpush1.bf16.msra.mxu0 %v242
    %263 = vmatprep.subr.bf16.mxu0 0
    %264 = vmatpush1.bf16.msra.mxu0 %v243
    %265 = vmatprep.subr.bf16.mxu0 0
    %266 = vmatpush1.bf16.msra.mxu0 %v244
    %267 = vmatprep.subr.bf16.mxu0 0
    %268 = vmatpush1.bf16.msra.mxu0 %v245
    %269 = vmatprep.subr.bf16.mxu0 0
    %270 = vmatpush1.bf16.msra.mxu0 %v246
    %271 = vmatprep.subr.bf16.mxu0 0
    %272 = vmatpush1.bf16.msra.mxu0 0
    %273 = vmatprep.subr.bf16.mxu0 0
    %274 = vmatpush1.bf16.msra.mxu0 0
    %275 = vmatprep.subr.bf16.mxu0 0
    %276 = vmatpush1.bf16.msra.mxu0 0
    %277 = vmatprep.subr.bf16.mxu0 0
    %278 = vmatpush1.bf16.msra.mxu0 0
    %279 = vmatprep.subr.bf16.mxu0 0
    %280 = vmatpush1.bf16.msra.mxu0 0
    %281 = vmatprep.subr.bf16.mxu0 0
    %282 = vmatpush1.bf16.msra.mxu0 0
    %283 = vmatprep.subr.bf16.mxu0 0
    %284 = vmatpush1.bf16.msra.mxu0 0
    %285 = vmatprep.subr.bf16.mxu0 0
    %286 = vmatpush1.bf16.msra.mxu0 0
    %287 = vmatprep.mubr.bf16.mxu0 0
    %288 = vmatmul.mubr.bf16.gmra.mrb[0].mxu0 %v183
    %v289 = vpop.f32.mrb[0].mxu0
    %v290 = vadd.f32 %v205, %v289
    %v291 = vpop.f32.mrb[0].mxu0
    %v292 = vpop.f32.mrb[0].mxu0
    %v293 = vadd.f32 %v205, %v292
    %v294 = vpop.f32.mrb[0].mxu0
    %295 = vdwg.mxu0
    %296 = vst [vmem:[#allocation8] sm:$0xff] %v290
    %297 = vst [vmem:[#allocation8 + $0x8] sm:$0xff] %v293
    // Predicated region
    $region34: #{tpu_custom_call.1} parent=1 // pred_check
      _
    $region35: #{tpu_custom_call.1} parent=1 // pred_check_branch
      %299 = sbr.rel (0) target = $region37
    $region36: #{tpu_custom_call.1} parent=1 // pred_region
      %s301 = ssub.s32 256, 256
      %302 = vsyncadd [#allocation4], %s301
      %s303 = sshll.u32 [#allocation8], 4
      %s304 = int_to_ptr.vmem [resolvable:$true] %s303
      %309 = dma.vmem_to_hbm [thread:$0]  %s304, 256, %s5, [#allocation4], 128, 128, 8
    $region37: #{tpu_custom_call.1} parent=1 // pred_fallthru
      _
    // Predicated region
    $region38: #{tpu_custom_call.1} parent=1 // pred_check
      _
    $region39: #{tpu_custom_call.1} parent=1 // pred_check_branch
      %311 = sbr.rel (0) target = $region41
    $region40: #{tpu_custom_call.1} parent=1 // pred_region
      %312 = dma.done [#allocation4], 256
    $region41: #{tpu_custom_call.1} parent=1 // pred_fallthru
      _
    %313 = vsyncpa [#allocation3], 1
    %314 = vsyncpa [#allocation6], 1
    %315 = vsyncpa [#allocation4], 1

</llo_original>
